<compile_context>
chip_gen: v7x
topology: tpu7x:2x2x1
jax: 0.10.0
libtpu: 0.0.40
codegen_flags: <defaults>
</compile_context>

<pallas_src>
import jax
import jax.numpy as jnp
from jax import lax
from jax.experimental import pallas as pl
from jax.experimental.pallas import tpu as pltpu


def _round_up(x, m):
    return (x + m - 1) // m * m


def out_value_kernel(x_ref, t_ref, w1x_ref, w1t_ref, b1_ref, w2_ref, b2_ref, o_ref):
    # Cast activations f32 -> bf16 on the VPU (hidden under the MXU), then
    # fold the concat([x, t]) @ W1 into two bf16 MXU matmuls with f32 acc.
    xb = x_ref[...].astype(jnp.bfloat16)
    tb = t_ref[...].astype(jnp.bfloat16)
    h = (
        jnp.dot(xb, w1x_ref[...], preferred_element_type=jnp.float32)
        + jnp.dot(tb, w1t_ref[...], preferred_element_type=jnp.float32)
        + b1_ref[...]                                    # (1, mid_pad) broadcast
    )                                                    # (TB, mid_pad) f32

    # Mish in f32: x * tanh(softplus(x)) = x * n/(n+2), n = e*(e+2), e = exp(x).
    # exp + approx reciprocal live on the EUP; single overflow mask, reused.
    big = h > 20.0
    e = jnp.exp(jnp.where(big, 0.0, h))
    n = e * (e + 2.0)
    mish = jnp.where(big, h, h * n * pl.reciprocal(n + 2.0, approx=True))

    # Second Linear (out_features == 1): w2 (1, mid) contracted against
    # mish (TB, mid) on the mid axis -> lane-dense (1, TB) output row.
    o_row = lax.dot_general(
        w2_ref[...],
        mish.astype(jnp.bfloat16),
        dimension_numbers=(((1,), (1,)), ((), ())),
        preferred_element_type=jnp.float32,
    )                                                    # (1, TB) f32
    o_ref[...] = o_row + b2_ref[0]                       # scalar bias from SMEM


def prepare_params(params, fc_dim, embed_dim):
    """One-time weight prep: split/transpose/pad(mid)/cast (hoisted out of forward)."""
    w1, b1, w2, b2 = params["w1"], params["b1"], params["w2"], params["b2"]
    mid = w1.shape[0]
    mid_pad = _round_up(mid, 128)
    pad_n = ((0, 0), (0, mid_pad - mid))
    # PyTorch Linear weight is (out, in); kernel wants (in, out). Only the mid
    # (output/lane) axis is padded; the K axes stay at full array extent so the
    # unpadded f32 activations match.
    w1x = jnp.pad(w1[:, :fc_dim].T, pad_n).astype(jnp.bfloat16)   # (fc_dim, mid_pad)
    w1t = jnp.pad(w1[:, fc_dim:].T, pad_n).astype(jnp.bfloat16)   # (embed_dim, mid_pad)
    b1r = jnp.pad(b1.reshape(1, -1), pad_n).astype(jnp.float32)   # (1, mid_pad)
    w2r = jnp.pad(w2.reshape(1, -1), pad_n).astype(jnp.bfloat16)  # (1, mid_pad)
    b2r = b2.reshape(1).astype(jnp.float32)                       # (1,) -> SMEM
    return {
        "w1x": w1x, "w1t": w1t, "b1": b1r, "w2": w2r, "b2": b2r,
        "fc_dim": fc_dim, "embed_dim": embed_dim, "mid_pad": mid_pad,
    }


def out_value_function_block(hidden_states, temb, prep):
    """hidden_states: (B, C, L) float32 (NCL, like PyTorch); temb: (B, embed_dim)."""
    B = hidden_states.shape[0]
    fc_dim, embed_dim, mid_pad = prep["fc_dim"], prep["embed_dim"], prep["mid_pad"]

    x = hidden_states.reshape(B, -1)
    assert x.shape[1] == fc_dim and temb.shape[1] == embed_dim

    # Batch tile: 128-lane aligned once B >= 128 (lane-dense output stores),
    # 8-sublane aligned for tiny B. Split so B >= 256 gives >= 2 tiles for the
    # "parallel" axis (v7x has 2 TensorCores) and for DMA/compute overlap.
    if B >= 128:
        TB = min(512, _round_up(B, 128))
        if B >= 256:
            TB = min(TB, _round_up((B + 1) // 2, 128))
    else:
        TB = _round_up(B, 8)
    B_pad = _round_up(B, TB)
    n_tiles = B_pad // TB

    # Only the batch axis is padded; activations stay f32 (cast happens in-kernel).
    xp = x if B_pad == B else jnp.pad(x, ((0, B_pad - B), (0, 0)))
    tp = temb if B_pad == B else jnp.pad(temb, ((0, B_pad - B), (0, 0)))

    # VMEM budget: weights single-buffered + double-buffered f32 activation tiles
    # + output rows, with headroom; capped at ~75% of device VMEM (~48 MiB v7x).
    weight_bytes = (prep["w1x"].size * 2 + prep["w1t"].size * 2
                    + prep["b1"].size * 4 + prep["w2"].size * 2)
    act_bytes = 2 * TB * (fc_dim + embed_dim) * 4
    out_bytes = 2 * TB * 4
    need = weight_bytes + act_bytes + out_bytes
    try:
        cap = int(pltpu.get_tpu_info().vmem_capacity_bytes) * 3 // 4
    except Exception:
        cap = 48 * 1024 * 1024
    vmem_limit = int(min(max(2 * need + (4 << 20), 32 << 20), cap))

    flops = 2 * B_pad * (fc_dim + embed_dim) * mid_pad + 2 * B_pad * mid_pad
    transcendentals = 2 * B_pad * mid_pad
    bytes_accessed = (B_pad * (fc_dim + embed_dim) * 4 + weight_bytes
                      + prep["b2"].size * 4 + B_pad * 4)

    wspec = dict(pipeline_mode=pl.Buffered(1))   # constant blocks: single VMEM copy

    out_rows = pl.pallas_call(
        out_value_kernel,
        out_shape=jax.ShapeDtypeStruct((1, B_pad), jnp.float32),
        grid=(n_tiles,),
        in_specs=[
            pl.BlockSpec((TB, fc_dim), lambda i: (i, 0)),              # x tile (pipelined, f32)
            pl.BlockSpec((TB, embed_dim), lambda i: (i, 0)),           # temb tile (pipelined, f32)
            pl.BlockSpec((fc_dim, mid_pad), lambda i: (0, 0), **wspec),    # W1[:, :fc]^T
            pl.BlockSpec((embed_dim, mid_pad), lambda i: (0, 0), **wspec), # W1[:, fc:]^T
            pl.BlockSpec((1, mid_pad), lambda i: (0, 0), **wspec),         # b1
            pl.BlockSpec((1, mid_pad), lambda i: (0, 0), **wspec),         # w2 row
            pl.BlockSpec(memory_space=pltpu.MemorySpace.SMEM),             # b2 scalar
        ],
        out_specs=pl.BlockSpec((1, TB), lambda i: (0, i)),             # lane-dense row blocks
        compiler_params=pltpu.CompilerParams(
            dimension_semantics=("parallel",),
            vmem_limit_bytes=vmem_limit,
        ),
        cost_estimate=pl.CostEstimate(
            flops=int(flops),
            transcendentals=int(transcendentals),
            bytes_accessed=int(bytes_accessed),
        ),
    )(xp, tp, prep["w1x"], prep["w1t"], prep["b1"], prep["w2"], prep["b2"])

    # (1, B_pad) lane-dense row -> (B, 1)
    return out_rows[0, :B].reshape(B, 1)


def init_params(key, fc_dim, embed_dim):
    mid = fc_dim // 2
    k1, k2, k3, k4 = jax.random.split(key, 4)
    bound1 = 1.0 / jnp.sqrt(fc_dim + embed_dim)
    bound2 = 1.0 / jnp.sqrt(mid)
    return {
        "w1": jax.random.uniform(k1, (mid, fc_dim + embed_dim), jnp.float32, -bound1, bound1),
        "b1": jax.random.uniform(k2, (mid,), jnp.float32, -bound1, bound1),
        "w2": jax.random.uniform(k3, (1, mid), jnp.float32, -bound2, bound2),
        "b2": jax.random.uniform(k4, (1,), jnp.float32, -bound2, bound2),
    }


def reference(hidden_states, temb, params):
    B = hidden_states.shape[0]
    h = jnp.concatenate([hidden_states.reshape(B, -1), temb], axis=-1)
    h = h @ params["w1"].T + params["b1"]
    h = h * jnp.tanh(jax.nn.softplus(h))
    return h @ params["w2"].T + params["b2"]


if __name__ == "__main__":
    key = jax.random.PRNGKey(0)
    k_x, k_t, k_p = jax.random.split(key, 3)

    B, C, L = 2, 8, 4          # hidden_states (B, C, L) -> fc_dim = C*L = 32
    fc_dim = C * L
    embed_dim = 32

    hidden_states = jax.random.normal(k_x, (B, C, L), jnp.float32)
    temb = jax.random.normal(k_t, (B, embed_dim), jnp.float32)
    params = init_params(k_p, fc_dim, embed_dim)
    prep = prepare_params(params, fc_dim, embed_dim)   # one-time weight prep

    out = out_value_function_block(hidden_states, temb, prep)
    out = jax.block_until_ready(out)

    ref = reference(hidden_states, temb, params)
    assert out.shape == (B, 1), out.shape
    # bf16 matmul operands + approx reciprocal -> loosened tolerance vs f32 reference.
    assert jnp.allclose(out, ref, atol=3e-2, rtol=3e-2), (out, ref)
    print("KERNEL_OK")
</pallas_src>

<mosaic_0001>
module attributes {stable_mosaic.version = 11 : i64} {
  func.func @out_value_kernel(%arg0: i32, %arg1: memref<8x32xf32, #tpu.memory_space<vmem>>, %arg2: memref<8x32xf32, #tpu.memory_space<vmem>>, %arg3: memref<32x128xbf16, #tpu.memory_space<vmem>>, %arg4: memref<32x128xbf16, #tpu.memory_space<vmem>>, %arg5: memref<1x128xf32, #tpu.memory_space<vmem>>, %arg6: memref<1x128xbf16, #tpu.memory_space<vmem>>, %arg7: memref<1xf32, #tpu.memory_space<smem>>, %arg8: memref<1x8xf32, #tpu.memory_space<vmem>>) attributes {dimension_semantics = [#tpu.dimension_semantics<parallel>], iteration_bounds = array<i64: 1>, scalar_prefetch = 0 : i64, scratch_operands = 0 : i64, tpu.core_type = #tpu.core_type<tc>, window_params = [{transform_indices = @transform_0, window_bounds = array<i64: 8, 32>}, {transform_indices = @transform_1, window_bounds = array<i64: 8, 32>}, {pipeline_mode = #tpu.pipeline_mode<synchronous>, transform_indices = @transform_2, window_bounds = array<i64: 32, 128>}, {pipeline_mode = #tpu.pipeline_mode<synchronous>, transform_indices = @transform_3, window_bounds = array<i64: 32, 128>}, {pipeline_mode = #tpu.pipeline_mode<synchronous>, transform_indices = @transform_4, window_bounds = array<i64: 1, 128>}, {pipeline_mode = #tpu.pipeline_mode<synchronous>, transform_indices = @transform_5, window_bounds = array<i64: 1, 128>}, {transform_indices = @transform_6, window_bounds = array<i64: 1>}, {transform_indices = @transform_7, window_bounds = array<i64: 1, 8>}]} {
    %c0 = arith.constant 0 : index
    %c0_0 = arith.constant 0 : index
    %0 = vector.load %arg1[%c0, %c0_0] : memref<8x32xf32, #tpu.memory_space<vmem>>, vector<8x32xf32>
    %1 = arith.truncf %0 : vector<8x32xf32> to vector<8x32xbf16>
    %c0_1 = arith.constant 0 : index
    %c0_2 = arith.constant 0 : index
    %2 = vector.load %arg2[%c0_1, %c0_2] : memref<8x32xf32, #tpu.memory_space<vmem>>, vector<8x32xf32>
    %3 = arith.truncf %2 : vector<8x32xf32> to vector<8x32xbf16>
    %c0_3 = arith.constant 0 : index
    %c0_4 = arith.constant 0 : index
    %4 = vector.load %arg3[%c0_3, %c0_4] : memref<32x128xbf16, #tpu.memory_space<vmem>>, vector<32x128xbf16>
    %cst = arith.constant dense<0.000000e+00> : vector<8x128xf32>
    %5 = tpu.matmul %1, %4, %cst {dimension_numbers = #tpu.dot_dimension_numbers<[1], [0], [0], [1], [0, 0, 1, 1], [], []>} : vector<8x32xbf16>, vector<32x128xbf16>, vector<8x128xf32> -> vector<8x128xf32>
    %c0_5 = arith.constant 0 : index
    %c0_6 = arith.constant 0 : index
    %6 = vector.load %arg4[%c0_5, %c0_6] : memref<32x128xbf16, #tpu.memory_space<vmem>>, vector<32x128xbf16>
    %cst_7 = arith.constant dense<0.000000e+00> : vector<8x128xf32>
    %7 = tpu.matmul %3, %6, %cst_7 {dimension_numbers = #tpu.dot_dimension_numbers<[1], [0], [0], [1], [0, 0, 1, 1], [], []>} : vector<8x32xbf16>, vector<32x128xbf16>, vector<8x128xf32> -> vector<8x128xf32>
    %8 = arith.addf %5, %7 : vector<8x128xf32>
    %c0_8 = arith.constant 0 : index
    %c0_9 = arith.constant 0 : index
    %9 = vector.load %arg5[%c0_8, %c0_9] : memref<1x128xf32, #tpu.memory_space<vmem>>, vector<1x128xf32>
    %10 = vector.broadcast %9 : vector<1x128xf32> to vector<8x128xf32>
    %11 = arith.addf %8, %10 : vector<8x128xf32>
    %cst_10 = arith.constant 2.000000e+01 : f32
    %12 = vector.broadcast %cst_10 : f32 to vector<8x128xf32>
    %13 = arith.cmpf ogt, %11, %12 : vector<8x128xf32>
    %cst_11 = arith.constant 0.000000e+00 : f32
    %14 = vector.broadcast %cst_11 : f32 to vector<8x128xf32>
    %15 = arith.select %13, %14, %11 : vector<8x128xi1>, vector<8x128xf32>
    %16 = math.exp %15 : vector<8x128xf32>
    %cst_12 = arith.constant 2.000000e+00 : f32
    %17 = vector.broadcast %cst_12 : f32 to vector<8x128xf32>
    %18 = arith.addf %16, %17 : vector<8x128xf32>
    %19 = arith.mulf %16, %18 : vector<8x128xf32>
    %20 = arith.mulf %11, %19 : vector<8x128xf32>
    %cst_13 = arith.constant 2.000000e+00 : f32
    %21 = vector.broadcast %cst_13 : f32 to vector<8x128xf32>
    %22 = arith.addf %19, %21 : vector<8x128xf32>
    %23 = tpu.reciprocal %22 {approx = true} : vector<8x128xf32> -> vector<8x128xf32>
    %24 = arith.mulf %20, %23 : vector<8x128xf32>
    %25 = arith.select %13, %11, %24 : vector<8x128xi1>, vector<8x128xf32>
    %c0_14 = arith.constant 0 : index
    %c0_15 = arith.constant 0 : index
    %26 = vector.load %arg6[%c0_14, %c0_15] : memref<1x128xbf16, #tpu.memory_space<vmem>>, vector<1x128xbf16>
    %27 = arith.truncf %25 : vector<8x128xf32> to vector<8x128xbf16>
    %cst_16 = arith.constant dense<0.000000e+00> : vector<1x8xf32>
    %28 = tpu.matmul %26, %27, %cst_16 {dimension_numbers = #tpu.dot_dimension_numbers<[1], [1], [0], [0], [0, 0, 1, 0], [], []>} : vector<1x128xbf16>, vector<8x128xbf16>, vector<1x8xf32> -> vector<1x8xf32>
    %c0_17 = arith.constant 0 : index
    %29 = memref.load %arg7[%c0_17] : memref<1xf32, #tpu.memory_space<smem>>
    %30 = vector.broadcast %29 : f32 to vector<1x8xf32>
    %31 = arith.addf %28, %30 : vector<1x8xf32>
    %c0_18 = arith.constant 0 : index
    %c0_19 = arith.constant 0 : index
    %32 = vector.load %arg8[%c0_18, %c0_19] : memref<1x8xf32, #tpu.memory_space<vmem>>, vector<1x8xf32>
    tpu.vector_store %arg8[%c0_18, %c0_19], %31 {strides = array<i32>} : memref<1x8xf32, #tpu.memory_space<vmem>>, vector<1x8xf32>,
    return
  }
  func.func @transform_0(%arg0: i32) -> (i32, i32) {
    %c0_i32 = arith.constant 0 : i32
    %c0_i32_0 = arith.constant 0 : i32
    return %arg0, %c0_i32 : i32, i32
  }
  func.func @transform_1(%arg0: i32) -> (i32, i32) {
    %c0_i32 = arith.constant 0 : i32
    %c0_i32_0 = arith.constant 0 : i32
    return %arg0, %c0_i32 : i32, i32
  }
  func.func @transform_2(%arg0: i32) -> (i32, i32) {
    %c0_i32 = arith.constant 0 : i32
    %c0_i32_0 = arith.constant 0 : i32
    %c0_i32_1 = arith.constant 0 : i32
    return %c0_i32, %c0_i32_0 : i32, i32
  }
  func.func @transform_3(%arg0: i32) -> (i32, i32) {
    %c0_i32 = arith.constant 0 : i32
    %c0_i32_0 = arith.constant 0 : i32
    %c0_i32_1 = arith.constant 0 : i32
    return %c0_i32, %c0_i32_0 : i32, i32
  }
  func.func @transform_4(%arg0: i32) -> (i32, i32) {
    %c0_i32 = arith.constant 0 : i32
    %c0_i32_0 = arith.constant 0 : i32
    %c0_i32_1 = arith.constant 0 : i32
    return %c0_i32, %c0_i32_0 : i32, i32
  }
  func.func @transform_5(%arg0: i32) -> (i32, i32) {
    %c0_i32 = arith.constant 0 : i32
    %c0_i32_0 = arith.constant 0 : i32
    %c0_i32_1 = arith.constant 0 : i32
    return %c0_i32, %c0_i32_0 : i32, i32
  }
  func.func @transform_6(%arg0: i32) -> i32 {
    %c0_i32 = arith.constant 0 : i32
    %c0_i32_0 = arith.constant 0 : i32
    return %c0_i32 : i32
  }
  func.func @transform_7(%arg0: i32) -> (i32, i32) {
    %c0_i32 = arith.constant 0 : i32
    %c0_i32_0 = arith.constant 0 : i32
    return %c0_i32, %arg0 : i32, i32
  }
}

</mosaic_0001>

<llo_original>
// kernel: tpu_custom_call.1
$region0: #{tpu_custom_call.1}
  #allocation0 [shape = 'u32[]', space=smem, size = 0x4, offset = 0x4, fixed_abs, tag = 'smem constant byte address 0x4 - core index']
  #allocation1 [shape = 'u32[144,128]{1,0:T(1,128)}', space=vmem, size = 0x12000, scoped, tag = 'internal scratch']
  #allocation2 [shape = 'f32[1]{0:T(128)S(6)}', space=smem, size = 0x200, scoped, tag = 'scoped memory for tpu_custom_call.1']
  %s0 = inlined_call_operand.hbm [shape: f32[8,32], index: 0, kind: input, shape index: {}]
  %s1 = inlined_call_operand.hbm [shape: f32[8,32], index: 1, kind: input, shape index: {}]
  %s2 = inlined_call_operand.hbm [shape: bf16[32,128], index: 2, kind: input, shape index: {}]
  %s3 = inlined_call_operand.hbm [shape: bf16[32,128], index: 3, kind: input, shape index: {}]
  %s4 = inlined_call_operand.vmem [shape: f32[1,128], index: 4, kind: input, shape index: {}]
  %s5 = inlined_call_operand.vmem [shape: bf16[1,128], index: 5, kind: input, shape index: {}]
  %s6 = inlined_call_operand.<no memory space> [shape: f32[1], index: 6, kind: input, shape index: {}]
  %s7 = inlined_call_operand.hbm [shape: f32[1,8], index: 7, kind: output, shape index: {}]
  %s8 = sld [smem:[#allocation0]]
  $region54: #{tpu_custom_call.1} parent=0
    _
  %s10 = ssub.s32 1, %s8
  %s11 = scalar_select 0, %s10, %s8
  %12 = sst [smem:[#allocation2]] %s6
  $region1: #{tpu_custom_call.1} parent=0
    #allocation3 [shape = 'u8[4096]{0}', space=vmem, size = 0x1000, scoped, tag = 'input window, operand 0, single buffered']
    #allocation4 [shape = 's32[1]{0}', space=sflag, size = 0x4, scoped, tag = 'scoped memory for tpu_custom_call.1']
    #allocation5 [shape = 's32[1]{0}', space=sflag, size = 0x4, scoped, tag = 'scoped memory for tpu_custom_call.1']
    #allocation6 [shape = 'u8[4096]{0}', space=vmem, size = 0x1000, scoped, tag = 'input window, operand 1, single buffered']
    #allocation7 [shape = 's32[1]{0}', space=sflag, size = 0x4, scoped, tag = 'scoped memory for tpu_custom_call.1']
    #allocation8 [shape = 'u8[8192]{0}', space=vmem, size = 0x2000, scoped, tag = 'input window, operand 2, single buffered']
    #allocation9 [shape = 'u8[8192]{0}', space=vmem, size = 0x2000, scoped, tag = 'input window, operand 3, single buffered']
    #allocation10 [shape = 's32[1]{0}', space=sflag, size = 0x4, scoped, tag = 'scoped memory for tpu_custom_call.1']
    #allocation11 [shape = 'u8[512]{0}', space=vmem, size = 0x400, scoped, tag = 'output window, operand 0, single buffered']
    %13 = vsyncpa [#allocation4], 0
    %14 = vsyncpa [#allocation7], 0
    %15 = vsyncpa [#allocation10], 0
    %16 = vsyncpa [#allocation5], 0
    // Predicated region
    $region2: #{tpu_custom_call.1} parent=1 // pred_check
      _
    $region3: #{tpu_custom_call.1} parent=1 // pred_check_branch
      %18 = sbr.rel (0) target = $region5
    $region4: #{tpu_custom_call.1} parent=1 // pred_region
      %s20 = ssub.s32 128, 128
      %21 = vsyncadd [#allocation4], %s20
      %s23 = sshll.u32 [#allocation3], 4
      %s24 = int_to_ptr.vmem [resolvable:$true] %s23
      %26 = dma.hbm_to_vmem [thread:$0]  %s0, 128, %s24, [#allocation4]
    $region5: #{tpu_custom_call.1} parent=1 // pred_fallthru
      _
    // Predicated region
    $region6: #{tpu_custom_call.1} parent=1 // pred_check
      _
    $region7: #{tpu_custom_call.1} parent=1 // pred_check_branch
      %28 = sbr.rel (0) target = $region9
    $region8: #{tpu_custom_call.1} parent=1 // pred_region
      %s30 = ssub.s32 128, 128
      %31 = vsyncadd [#allocation7], %s30
      %s33 = sshll.u32 [#allocation6], 4
      %s34 = int_to_ptr.vmem [resolvable:$true] %s33
      %36 = dma.hbm_to_vmem [thread:$0]  %s1, 128, %s34, [#allocation7]
    $region9: #{tpu_custom_call.1} parent=1 // pred_fallthru
      _
    // Predicated region
    $region10: #{tpu_custom_call.1} parent=1 // pred_check
      _
    $region11: #{tpu_custom_call.1} parent=1 // pred_check_branch
      %38 = sbr.rel (0) target = $region13
    $region12: #{tpu_custom_call.1} parent=1 // pred_region
      %s40 = ssub.s32 256, 256
      %41 = vsyncadd [#allocation7], %s40
      %s42 = sshll.u32 [#allocation8], 4
      %s43 = int_to_ptr.vmem [resolvable:$true] %s42
      %48 = dma.hbm_to_vmem [thread:$0]  %s2, 256, %s43, [#allocation7], 64, 64, 4
    $region13: #{tpu_custom_call.1} parent=1 // pred_fallthru
      _
    // Predicated region
    $region14: #{tpu_custom_call.1} parent=1 // pred_check
      _
    $region15: #{tpu_custom_call.1} parent=1 // pred_check_branch
      %50 = sbr.rel (0) target = $region17
    $region16: #{tpu_custom_call.1} parent=1 // pred_region
      %s52 = ssub.s32 256, 256
      %53 = vsyncadd [#allocation10], %s52
      %s54 = sshll.u32 [#allocation9], 4
      %s55 = int_to_ptr.vmem [resolvable:$true] %s54
      %60 = dma.hbm_to_vmem [thread:$0]  %s3, 256, %s55, [#allocation10], 64, 64, 4
    $region17: #{tpu_custom_call.1} parent=1 // pred_fallthru
      _
    // Predicated region
    $region18: #{tpu_custom_call.1} parent=1 // pred_check
      _
    $region19: #{tpu_custom_call.1} parent=1 // pred_check_branch
      %62 = sbr.rel (0) target = $region21
    $region20: #{tpu_custom_call.1} parent=1 // pred_region
      _
    $region21: #{tpu_custom_call.1} parent=1 // pred_fallthru
      _
    // Predicated region
    $region22: #{tpu_custom_call.1} parent=1 // pred_check
      _
    $region23: #{tpu_custom_call.1} parent=1 // pred_check_branch
      %64 = sbr.rel (0) target = $region25
    $region24: #{tpu_custom_call.1} parent=1 // pred_region
      _
    $region25: #{tpu_custom_call.1} parent=1 // pred_fallthru
      _
    // Predicated region
    $region26: #{tpu_custom_call.1} parent=1 // pred_check
      _
    $region27: #{tpu_custom_call.1} parent=1 // pred_check_branch
      %66 = sbr.rel (0) target = $region29
    $region28: #{tpu_custom_call.1} parent=1 // pred_region
      _
    $region29: #{tpu_custom_call.1} parent=1 // pred_fallthru
      _
    // Predicated region
    $region30: #{tpu_custom_call.1} parent=1 // pred_check
      _
    $region31: #{tpu_custom_call.1} parent=1 // pred_check_branch
      %68 = sbr.rel (0) target = $region33
    $region32: #{tpu_custom_call.1} parent=1 // pred_region
      %69 = dma.done [#allocation4], 128
    $region33: #{tpu_custom_call.1} parent=1 // pred_fallthru
      _
    // Predicated region
    $region34: #{tpu_custom_call.1} parent=1 // pred_check
      _
    $region35: #{tpu_custom_call.1} parent=1 // pred_check_branch
      %71 = sbr.rel (0) target = $region37
    $region36: #{tpu_custom_call.1} parent=1 // pred_region
      %72 = dma.done [#allocation7], 128
    $region37: #{tpu_custom_call.1} parent=1 // pred_fallthru
      _
    // Predicated region
    $region38: #{tpu_custom_call.1} parent=1 // pred_check
      _
    $region39: #{tpu_custom_call.1} parent=1 // pred_check_branch
      %74 = sbr.rel (0) target = $region41
    $region40: #{tpu_custom_call.1} parent=1 // pred_region
      %75 = dma.done [#allocation7], 256
    $region41: #{tpu_custom_call.1} parent=1 // pred_fallthru
      _
    // Predicated region
    $region42: #{tpu_custom_call.1} parent=1 // pred_check
      _
    $region43: #{tpu_custom_call.1} parent=1 // pred_check_branch
      %77 = sbr.rel (0) target = $region45
    $region44: #{tpu_custom_call.1} parent=1 // pred_region
      %78 = dma.done [#allocation10], 256
    $region45: #{tpu_custom_call.1} parent=1 // pred_fallthru
      _
    %v80 = vld [vmem:[#allocation3] sm:$0xff]
    %v81 = vpack.c.bf16 %v80, %v80
    %v82 = vld [vmem:[#allocation6] sm:$0xff]
    %v83 = vpack.c.bf16 %v82, %v82
    %v84 = vld [vmem:[#allocation8] sm:$0xf]
    %v85 = vld [vmem:[#allocation8 + $0x4] sm:$0xf]
    %v86 = vld [vmem:[#allocation8 + $0x8] sm:$0xf]
    %v87 = vld [vmem:[#allocation8 + $0xc] sm:$0xf]
    %v88 = vld [vmem:[#allocation9] sm:$0xf]
    %v89 = vld [vmem:[#allocation9 + $0x4] sm:$0xf]
    %v90 = vld [vmem:[#allocation9 + $0x8] sm:$0xf]
    %v91 = vld [vmem:[#allocation9 + $0xc] sm:$0xf]
    %v96 = vunpack.c.l.b16 %v88
    %v97 = vunpack.c.l.b16 %v89
    %v98 = vunpack.c.l.b16 %v90
    %v99 = vunpack.c.l.b16 %v91
    %v100 = vpack.c.b16 %v97, %v96
    %v101 = vpack.c.b16 %v99, %v98
    %vm104 = vcmask 261120
    %v106 = vsel %vm104, %v83, 0
    %108 = vmatprep.subr.bf16.mxu0 0
    %109 = vmatpush1.bf16.msra.mxu0 %v100
    %110 = vmatprep.subr.bf16.mxu0 0
    %111 = vmatpush1.bf16.msra.mxu0 %v101
    %112 = vmatprep.subr.bf16.mxu0 0
    %113 = vmatpush1.bf16.msra.mxu0 0
    %114 = vmatprep.subr.bf16.mxu0 0
    %115 = vmatpush1.bf16.msra.mxu0 0
    %116 = vmatprep.subr.bf16.mxu0 0
    %117 = vmatpush1.bf16.msra.mxu0 0
    %118 = vmatprep.subr.bf16.mxu0 0
    %119 = vmatpush1.bf16.msra.mxu0 0
    %120 = vmatprep.subr.bf16.mxu0 0
    %121 = vmatpush1.bf16.msra.mxu0 0
    %122 = vmatprep.subr.bf16.mxu0 0
    %123 = vmatpush1.bf16.msra.mxu0 0
    %124 = vmatprep.subr.bf16.mxu0 0
    %125 = vmatpush1.bf16.msra.mxu0 0
    %126 = vmatprep.subr.bf16.mxu0 0
    %127 = vmatpush1.bf16.msra.mxu0 0
    %128 = vmatprep.subr.bf16.mxu0 0
    %129 = vmatpush1.bf16.msra.mxu0 0
    %130 = vmatprep.subr.bf16.mxu0 0
    %131 = vmatpush1.bf16.msra.mxu0 0
    %132 = vmatprep.subr.bf16.mxu0 0
    %133 = vmatpush1.bf16.msra.mxu0 0
    %134 = vmatprep.subr.bf16.mxu0 0
    %135 = vmatpush1.bf16.msra.mxu0 0
    %136 = vmatprep.subr.bf16.mxu0 0
    %137 = vmatpush1.bf16.msra.mxu0 0
    %138 = vmatprep.subr.bf16.mxu0 0
    %139 = vmatpush1.bf16.msra.mxu0 0
    %140 = vmatprep.mubr.bf16.mxu0 0
    %141 = vmatmul.mubr.bf16.gmra.mrb[0].mxu0 %v106
    %v142 = vpop.f32.mrb[0].mxu0
    %v143 = vadd.f32 0.0, %v142
    %v144 = vpop.f32.mrb[0].mxu0
    %v145 = vpop.f32.mrb[0].mxu0
    %v146 = vpop.f32.mrb[0].mxu0
    %147 = vdwg.mxu0
    %v152 = vunpack.c.l.b16 %v84
    %v153 = vunpack.c.l.b16 %v85
    %v154 = vunpack.c.l.b16 %v86
    %v155 = vunpack.c.l.b16 %v87
    %v156 = vpack.c.b16 %v153, %v152
    %v157 = vpack.c.b16 %v155, %v154
    %v161 = vsel %vm104, %v81, 0
    %163 = vmatprep.subr.bf16.mxu0 0
    %164 = vmatpush1.bf16.msra.mxu0 %v156
    %165 = vmatprep.subr.bf16.mxu0 0
    %166 = vmatpush1.bf16.msra.mxu0 %v157
    %167 = vmatprep.subr.bf16.mxu0 0
    %168 = vmatpush1.bf16.msra.mxu0 0
    %169 = vmatprep.subr.bf16.mxu0 0
    %170 = vmatpush1.bf16.msra.mxu0 0
    %171 = vmatprep.subr.bf16.mxu0 0
    %172 = vmatpush1.bf16.msra.mxu0 0
    %173 = vmatprep.subr.bf16.mxu0 0
    %174 = vmatpush1.bf16.msra.mxu0 0
    %175 = vmatprep.subr.bf16.mxu0 0
    %176 = vmatpush1.bf16.msra.mxu0 0
    %177 = vmatprep.subr.bf16.mxu0 0
    %178 = vmatpush1.bf16.msra.mxu0 0
    %179 = vmatprep.subr.bf16.mxu0 0
    %180 = vmatpush1.bf16.msra.mxu0 0
    %181 = vmatprep.subr.bf16.mxu0 0
    %182 = vmatpush1.bf16.msra.mxu0 0
    %183 = vmatprep.subr.bf16.mxu0 0
    %184 = vmatpush1.bf16.msra.mxu0 0
    %185 = vmatprep.subr.bf16.mxu0 0
    %186 = vmatpush1.bf16.msra.mxu0 0
    %187 = vmatprep.subr.bf16.mxu0 0
    %188 = vmatpush1.bf16.msra.mxu0 0
    %189 = vmatprep.subr.bf16.mxu0 0
    %190 = vmatpush1.bf16.msra.mxu0 0
    %191 = vmatprep.subr.bf16.mxu0 0
    %192 = vmatpush1.bf16.msra.mxu0 0
    %193 = vmatprep.subr.bf16.mxu0 0
    %194 = vmatpush1.bf16.msra.mxu0 0
    %195 = vmatprep.mubr.bf16.mxu0 0
    %196 = vmatmul.mubr.bf16.gmra.mrb[0].mxu0 %v161
    %v197 = vpop.f32.mrb[0].mxu0
    %v198 = vadd.f32 %v143, %v197
    %v199 = vpop.f32.mrb[0].mxu0
    %v200 = vpop.f32.mrb[0].mxu0
    %v201 = vpop.f32.mrb[0].mxu0
    %202 = vdwg.mxu0
    %v203 = vld [vmem:[%s4] sm:$0x1]
    %v205 = vlaneseq
    %v206 = vshrl.u32 %v205, 7
    %v207 = vsub.s32 0, %v206
    %v208 = vrot.slane %v203, %v207
    %v210 = vadd.f32 %v198, %v208
    %vm211 = vcmp.gt.f32.partialorder %v210, 20.0
    %v212 = vsel %vm211, 0.0, %v210
    %v213 = vmul.f32 %v212, 1.442695
    %v214 = vpow.pop %v213
    %v215 = vadd.f32 %v214, 2.0
    %v216 = vmul.f32 %v214, %v215
    %v217 = vmul.f32 %v210, %v216
    %v218 = vadd.f32 %v216, 2.0
    %v219 = vrcp.pop %v218
    %v220 = vmul.f32 %v217, %v219
    %v221 = vsel %vm211, %v210, %v220
    %v222 = vld [vmem:[%s5] sm:$0x1]
    %v223 = vpack.c.bf16 %v221, %v221
    %s224 = sld [smem:[#allocation2]]
    %v225 = vstv %s224
    %226 = vmatprep.subr.bf16.mxu0 0
    %227 = vmatpush1.bf16.xpose.msra.mxu0 %v223
    %228 = vmatprep.subr.bf16.mxu0 0
    %229 = vmatpush1.bf16.xpose.msra.mxu0 0
    %230 = vmatprep.subr.bf16.mxu0 0
    %231 = vmatpush1.bf16.xpose.msra.mxu0 0
    %232 = vmatprep.subr.bf16.mxu0 0
    %233 = vmatpush1.bf16.xpose.msra.mxu0 0
    %234 = vmatprep.subr.bf16.mxu0 0
    %235 = vmatpush1.bf16.xpose.msra.mxu0 0
    %236 = vmatprep.subr.bf16.mxu0 0
    %237 = vmatpush1.bf16.xpose.msra.mxu0 0
    %238 = vmatprep.subr.bf16.mxu0 0
    %239 = vmatpush1.bf16.xpose.msra.mxu0 0
    %240 = vmatprep.subr.bf16.mxu0 0
    %241 = vmatpush1.bf16.xpose.msra.mxu0 0
    %242 = vmatprep.subr.bf16.mxu0 0
    %243 = vmatpush1.bf16.xpose.msra.mxu0 0
    %244 = vmatprep.subr.bf16.mxu0 0
    %245 = vmatpush1.bf16.xpose.msra.mxu0 0
    %246 = vmatprep.subr.bf16.mxu0 0
    %247 = vmatpush1.bf16.xpose.msra.mxu0 0
    %248 = vmatprep.subr.bf16.mxu0 0
    %249 = vmatpush1.bf16.xpose.msra.mxu0 0
    %250 = vmatprep.subr.bf16.mxu0 0
    %251 = vmatpush1.bf16.xpose.msra.mxu0 0
    %252 = vmatprep.subr.bf16.mxu0 0
    %253 = vmatpush1.bf16.xpose.msra.mxu0 0
    %254 = vmatprep.subr.bf16.mxu0 0
    %255 = vmatpush1.bf16.xpose.msra.mxu0 0
    %256 = vmatprep.subr.bf16.mxu0 0
    %257 = vmatpush1.bf16.xpose.msra.mxu0 0
    %258 = vmatprep.mubr.bf16.mxu0 0
    %259 = vmatmul.mubr.bf16.gmra.mrb[0].mxu0 %v222
    %v260 = vpop.f32.mrb[0].mxu0
    %v261 = vadd.f32 %v225, %v260
    %v262 = vpop.f32.mrb[0].mxu0
    %v263 = vpop.f32.mrb[0].mxu0
    %v264 = vpop.f32.mrb[0].mxu0
    %265 = vdwg.mxu0
    %vm266 = vcmask 57344
    %267 = vst.msk [vmem:[#allocation11] sm:$0x1] %vm266, %v261
    // Predicated region
    $region46: #{tpu_custom_call.1} parent=1 // pred_check
      _
    $region47: #{tpu_custom_call.1} parent=1 // pred_check_branch
      %269 = sbr.rel (0) target = $region49
    $region48: #{tpu_custom_call.1} parent=1 // pred_region
      %s271 = ssub.s32 16, 16
      %272 = vsyncadd [#allocation5], %s271
      %s274 = sshll.u32 [#allocation11], 4
      %s275 = int_to_ptr.vmem [resolvable:$true] %s274
      %277 = dma.vmem_to_hbm [thread:$0]  %s275, 16, %s7, [#allocation5]
    $region49: #{tpu_custom_call.1} parent=1 // pred_fallthru
      _
    // Predicated region
    $region50: #{tpu_custom_call.1} parent=1 // pred_check
      _
    $region51: #{tpu_custom_call.1} parent=1 // pred_check_branch
      %279 = sbr.rel (0) target = $region53
    $region52: #{tpu_custom_call.1} parent=1 // pred_region
      %280 = dma.done [#allocation5], 16
    $region53: #{tpu_custom_call.1} parent=1 // pred_fallthru
      _
    %281 = vsyncpa [#allocation4], 1
    %282 = vsyncpa [#allocation7], 1
    %283 = vsyncpa [#allocation10], 1
    %284 = vsyncpa [#allocation5], 1

</llo_original>
